<compile_context>
chip_gen: v7x
topology: tpu7x:2x2x1
jax: 0.10.0
libtpu: 0.0.40
codegen_flags: <defaults>
</compile_context>

<pallas_src>
import math
import jax
import jax.numpy as jnp
from jax.experimental import pallas as pl
from jax.experimental.pallas import tpu as pltpu

LANE = 128


def _round_up(n, m):
    return ((n + m - 1) // m) * m


def _pad_and_tile(dim, preferred):
    """Pad `dim` and pick a tile.

    Never shrinks the tile below `preferred` for divisibility reasons: if the
    lane-padded dim is <= `preferred`, the whole dim is one block; otherwise
    the dim is padded up to a multiple of `preferred` and the tile is
    `preferred`.  (`preferred` must be a multiple of 128.)
    """
    dp = _round_up(dim, LANE)
    if dp <= preferred:
        return dp, dp
    return _round_up(dim, preferred), preferred


def _support_kernel(x_ref, w_ref, s32_ref, s16_ref):
    """support = X @ W.

    f32 accumulation directly into the f32 output block (its block index is
    k-invariant so it stays VMEM-resident).  The bf16 copy consumed by pass 2's
    MXU is written once in the finalize.
    """
    @pl.when(pl.program_id(2) == 0)
    def _():
        s32_ref[...] = jnp.zeros_like(s32_ref)

    s32_ref[...] += jnp.dot(x_ref[...], w_ref[...],
                            preferred_element_type=jnp.float32)

    @pl.when(pl.program_id(2) == pl.num_programs(2) - 1)
    def _():
        s16_ref[...] = s32_ref[...].astype(jnp.bfloat16)


def _aggregate_kernel(a_ref, s_ref, self_ref, bias_ref, o_ref):
    """out = A^T @ support + support + bias.

    a_ref and s_ref are bf16 -> native single-pass bf16 x bf16 MXU matmul with
    f32 accumulation directly into the f32 output block (no scratch, no
    per-step upcast of the N x N operand).  The self term (f32) and bias
    initialize the accumulator at i == 0, so only the neighbor sum sees bf16
    rounding of `support`.
    """
    @pl.when(pl.program_id(2) == 0)
    def _():
        o_ref[...] = self_ref[...] + bias_ref[...]

    o_ref[...] += jnp.dot(a_ref[...], s_ref[...],
                          preferred_element_type=jnp.float32)


def graph_sage_conv(x, adj, weight, bias=None):
    """GraphSAGE layer forward: A^T @ (x @ W) + (x @ W) + b.

    x:      [N, F_in] node features
    adj:    [N, N] dense binary adjacency, adj[i, j] = 1 iff edge i -> j
            (exact equivalent of the coalesced COO indices used by index_add_)
    weight: [F_in, F_out]
    bias:   [F_out] or None
    """
    N, fin = x.shape
    fout = weight.shape[1]
    f32 = jnp.float32
    bf16 = jnp.bfloat16

    # Tile / padding selection (see header comment).
    n_pad, tm = _pad_and_tile(N, 512)            # output rows (both passes)
    fout_pad, tf = _pad_and_tile(fout, 512)      # output features
    fin_pad, tk1 = _pad_and_tile(fin, 1024)      # pass-1 reduction (F_in)
    tk2 = 1024 if (n_pad % 1024 == 0) else tm    # pass-2 reduction (src nodes)

    # Zero-padding to the tile grid is exact for every term.
    x_p = jnp.zeros((n_pad, fin_pad), f32).at[:N, :fin].set(x.astype(f32))
    w_p = jnp.zeros((fin_pad, fout_pad), f32).at[:fin, :fout].set(
        weight.astype(f32))
    if bias is None:
        b_p = jnp.zeros((1, fout_pad), f32)
    else:
        b_p = jnp.zeros((1, fout_pad), f32).at[0, :fout].set(bias.astype(f32))

    # Pure binary A^T, transposed & padded in bf16 ({0,1} values are exact in
    # bf16).  The +I self term is handled inside pass 2, not materialized here.
    a_t = jnp.zeros((n_pad, n_pad), bf16).at[:N, :N].set(adj.astype(bf16).T)

    # ---------------- pass 1: support = X @ W (f32 + bf16 copies) -----------
    support_f32, support_bf16 = pl.pallas_call(
        _support_kernel,
        out_shape=(jax.ShapeDtypeStruct((n_pad, fout_pad), f32),
                   jax.ShapeDtypeStruct((n_pad, fout_pad), bf16)),
        grid_spec=pltpu.PrefetchScalarGridSpec(
            num_scalar_prefetch=0,
            grid=(n_pad // tm, fout_pad // tf, fin_pad // tk1),
            in_specs=[
                pl.BlockSpec((tm, tk1), lambda m, f, k: (m, k)),
                pl.BlockSpec((tk1, tf), lambda m, f, k: (k, f)),
            ],
            out_specs=[
                pl.BlockSpec((tm, tf), lambda m, f, k: (m, f)),
                pl.BlockSpec((tm, tf), lambda m, f, k: (m, f)),
            ],
        ),
        compiler_params=pltpu.CompilerParams(
            dimension_semantics=("parallel", "parallel", "arbitrary")),
        cost_estimate=pl.CostEstimate(
            flops=2 * n_pad * fout_pad * fin_pad,
            transcendentals=0,
            bytes_accessed=4 * (n_pad * fin_pad + fin_pad * fout_pad
                                + n_pad * fout_pad)
                           + 2 * n_pad * fout_pad),
    )(x_p, w_p)

    # ---------------- pass 2: out = A^T @ support + support + bias ----------
    out_p = pl.pallas_call(
        _aggregate_kernel,
        out_shape=jax.ShapeDtypeStruct((n_pad, fout_pad), f32),
        grid_spec=pltpu.PrefetchScalarGridSpec(
            num_scalar_prefetch=0,
            grid=(n_pad // tm, fout_pad // tf, n_pad // tk2),
            in_specs=[
                pl.BlockSpec((tm, tk2), lambda j, f, i: (j, i)),   # A^T (bf16)
                pl.BlockSpec((tk2, tf), lambda j, f, i: (i, f)),   # support bf16
                pl.BlockSpec((tm, tf), lambda j, f, i: (j, f)),    # self term f32
                pl.BlockSpec((1, tf), lambda j, f, i: (0, f)),     # bias
            ],
            out_specs=pl.BlockSpec((tm, tf), lambda j, f, i: (j, f)),
        ),
        compiler_params=pltpu.CompilerParams(
            dimension_semantics=("parallel", "parallel", "arbitrary")),
        cost_estimate=pl.CostEstimate(
            flops=2 * n_pad * n_pad * fout_pad,
            transcendentals=0,
            bytes_accessed=2 * n_pad * n_pad            # bf16 adjacency stream
                           + 2 * n_pad * fout_pad       # bf16 support
                           + 4 * n_pad * fout_pad       # f32 self term
                           + 4 * n_pad * fout_pad       # f32 output
                           + 4 * fout_pad),             # bias
    )(a_t, support_bf16, support_f32, b_p)

    return out_p[:N, :fout]


if __name__ == "__main__":
    # Small synthetic graph: N nodes, F_in -> F_out features.
    N, F_IN, F_OUT = 16, 32, 32

    key = jax.random.PRNGKey(0)
    k_x, k_adj, k_w, k_b = jax.random.split(key, 4)

    # Node features.
    x = jax.random.normal(k_x, (N, F_IN), dtype=jnp.float32)

    # Dense binary adjacency (directed edges i -> j), ~20% density.
    adj = jax.random.bernoulli(k_adj, p=0.2, shape=(N, N)).astype(jnp.float32)

    # Parameter init matching reset_parameters(): uniform(-stdv, stdv),
    # stdv = 1 / sqrt(out_features).
    stdv = 1.0 / math.sqrt(F_OUT)
    weight = jax.random.uniform(k_w, (F_IN, F_OUT), minval=-stdv, maxval=stdv,
                                dtype=jnp.float32)
    bias = jax.random.uniform(k_b, (F_OUT,), minval=-stdv, maxval=stdv,
                              dtype=jnp.float32)

    out = graph_sage_conv(x, adj, weight, bias)
    out = jax.block_until_ready(out)

    # Pure-JAX reference of the PyTorch semantics (full-precision matmuls).
    hp = jax.lax.Precision.HIGHEST
    support_ref = jnp.dot(x, weight, precision=hp)
    ref = (jnp.dot(adj.T, support_ref, precision=hp)
           + support_ref + bias[None, :])

    assert out.shape == (N, F_OUT)
    # Neighbor aggregation runs as a bf16 x bf16 MXU matmul (f32 accumulate);
    # the adjacency ({0,1}), self term and bias are exact/f32, so the only
    # error source is bf16 rounding of `support` — tolerance set accordingly.
    assert jnp.allclose(out, ref, atol=2e-2, rtol=2e-2), "mismatch vs reference"

    print("KERNEL_OK")
</pallas_src>

<mosaic_0001>
module attributes {stable_mosaic.version = 11 : i64} {
  func.func @_support_kernel(%arg0: i32, %arg1: i32, %arg2: i32, %arg3: memref<128x128xf32, #tpu.memory_space<vmem>>, %arg4: memref<128x128xf32, #tpu.memory_space<vmem>>, %arg5: memref<128x128xf32, #tpu.memory_space<vmem>>, %arg6: memref<128x128xbf16, #tpu.memory_space<vmem>>) attributes {dimension_semantics = [#tpu.dimension_semantics<parallel>, #tpu.dimension_semantics<parallel>, #tpu.dimension_semantics<arbitrary>], iteration_bounds = array<i64: 1, 1, 1>, scalar_prefetch = 0 : i64, scratch_operands = 0 : i64, tpu.core_type = #tpu.core_type<tc>, window_params = [{transform_indices = @transform_0, window_bounds = array<i64: 128, 128>}, {transform_indices = @transform_1, window_bounds = array<i64: 128, 128>}, {transform_indices = @transform_2, window_bounds = array<i64: 128, 128>}, {transform_indices = @transform_3, window_bounds = array<i64: 128, 128>}]} {
    %c0_i32 = arith.constant 0 : i32
    %0 = arith.cmpi eq, %arg2, %c0_i32 : i32
    %1 = arith.extui %0 : i1 to i32
    %c0_i32_0 = arith.constant 0 : i32
    %2 = arith.cmpi ne, %1, %c0_i32_0 : i32
    scf.if %2 {
      %cst_10 = arith.constant 0.000000e+00 : f32
      %12 = vector.broadcast %cst_10 : f32 to vector<128x128xf32>
      %c0_11 = arith.constant 0 : index
      %c0_12 = arith.constant 0 : index
      %13 = vector.load %arg5[%c0_11, %c0_12] : memref<128x128xf32, #tpu.memory_space<vmem>>, vector<128x128xf32>
      tpu.vector_store %arg5[%c0_11, %c0_12], %12 {strides = array<i32>} : memref<128x128xf32, #tpu.memory_space<vmem>>, vector<128x128xf32>,
    } else {
    }
    %c0 = arith.constant 0 : index
    %c0_1 = arith.constant 0 : index
    %3 = vector.load %arg5[%c0, %c0_1] : memref<128x128xf32, #tpu.memory_space<vmem>>, vector<128x128xf32>
    %c0_2 = arith.constant 0 : index
    %c0_3 = arith.constant 0 : index
    %4 = vector.load %arg3[%c0_2, %c0_3] : memref<128x128xf32, #tpu.memory_space<vmem>>, vector<128x128xf32>
    %c0_4 = arith.constant 0 : index
    %c0_5 = arith.constant 0 : index
    %5 = vector.load %arg4[%c0_4, %c0_5] : memref<128x128xf32, #tpu.memory_space<vmem>>, vector<128x128xf32>
    %cst = arith.constant dense<0.000000e+00> : vector<128x128xf32>
    %6 = tpu.matmul %4, %5, %cst {dimension_numbers = #tpu.dot_dimension_numbers<[1], [0], [0], [1], [0, 0, 1, 1], [], []>} : vector<128x128xf32>, vector<128x128xf32>, vector<128x128xf32> -> vector<128x128xf32>
    %7 = arith.addf %3, %6 : vector<128x128xf32>
    %c0_6 = arith.constant 0 : index
    %c0_7 = arith.constant 0 : index
    %8 = vector.load %arg5[%c0_6, %c0_7] : memref<128x128xf32, #tpu.memory_space<vmem>>, vector<128x128xf32>
    tpu.vector_store %arg5[%c0_6, %c0_7], %7 {strides = array<i32>} : memref<128x128xf32, #tpu.memory_space<vmem>>, vector<128x128xf32>,
    %c0_i32_8 = arith.constant 0 : i32
    %9 = arith.cmpi eq, %arg2, %c0_i32_8 : i32
    %10 = arith.extui %9 : i1 to i32
    %c0_i32_9 = arith.constant 0 : i32
    %11 = arith.cmpi ne, %10, %c0_i32_9 : i32
    scf.if %11 {
      %c0_10 = arith.constant 0 : index
      %c0_11 = arith.constant 0 : index
      %12 = vector.load %arg5[%c0_10, %c0_11] : memref<128x128xf32, #tpu.memory_space<vmem>>, vector<128x128xf32>
      %13 = arith.truncf %12 : vector<128x128xf32> to vector<128x128xbf16>
      %c0_12 = arith.constant 0 : index
      %c0_13 = arith.constant 0 : index
      %14 = vector.load %arg6[%c0_12, %c0_13] : memref<128x128xbf16, #tpu.memory_space<vmem>>, vector<128x128xbf16>
      tpu.vector_store %arg6[%c0_12, %c0_13], %13 {strides = array<i32>} : memref<128x128xbf16, #tpu.memory_space<vmem>>, vector<128x128xbf16>,
    } else {
    }
    return
  }
  func.func @transform_0(%arg0: i32, %arg1: i32, %arg2: i32) -> (i32, i32) {
    %c0_i32 = arith.constant 0 : i32
    return %arg0, %arg2 : i32, i32
  }
  func.func @transform_1(%arg0: i32, %arg1: i32, %arg2: i32) -> (i32, i32) {
    %c0_i32 = arith.constant 0 : i32
    return %arg2, %arg1 : i32, i32
  }
  func.func @transform_2(%arg0: i32, %arg1: i32, %arg2: i32) -> (i32, i32) {
    %c0_i32 = arith.constant 0 : i32
    return %arg0, %arg1 : i32, i32
  }
  func.func @transform_3(%arg0: i32, %arg1: i32, %arg2: i32) -> (i32, i32) {
    %c0_i32 = arith.constant 0 : i32
    return %arg0, %arg1 : i32, i32
  }
}

</mosaic_0001>

<llo_original>
// kernel: tpu_custom_call.1
$region0: #{tpu_custom_call.1}
  #allocation0 [shape = 'u32[]', space=smem, size = 0x4, offset = 0x4, fixed_abs, tag = 'smem constant byte address 0x4 - core index']
  #allocation1 [shape = 'u32[144,128]{1,0:T(1,128)}', space=vmem, size = 0x12000, scoped, tag = 'internal scratch']
  %s0 = inlined_call_operand.hbm [shape: f32[128,128], index: 0, kind: input, shape index: {}]
  %s1 = inlined_call_operand.hbm [shape: f32[128,128], index: 1, kind: input, shape index: {}]
  %s2 = inlined_call_operand.hbm [shape: f32[128,128], index: 2, kind: output, shape index: {0}]
  %s3 = inlined_call_operand.hbm [shape: bf16[128,128], index: 3, kind: output, shape index: {1}]
  %4 = xla_tuple %s2, %s3
  %s5 = sld [smem:[#allocation0]]
  $region42: #{tpu_custom_call.1} parent=0
    _
  %s7 = ssub.s32 1, %s5
  %s8 = scalar_select 0, %s7, %s5
  $region1: #{tpu_custom_call.1} parent=0
    #allocation2 [shape = 'u8[65536]{0}', space=vmem, size = 0x10000, scoped, tag = 'input window, operand 0, single buffered']
    #allocation3 [shape = 's32[1]{0}', space=sflag, size = 0x4, scoped, tag = 'scoped memory for tpu_custom_call.1']
    #allocation4 [shape = 's32[1]{0}', space=sflag, size = 0x4, scoped, tag = 'scoped memory for tpu_custom_call.1']
    #allocation5 [shape = 'u8[65536]{0}', space=vmem, size = 0x10000, scoped, tag = 'input window, operand 1, single buffered']
    #allocation6 [shape = 's32[1]{0}', space=sflag, size = 0x4, scoped, tag = 'scoped memory for tpu_custom_call.1']
    #allocation7 [shape = 'u8[65536]{0}', space=vmem, size = 0x10000, scoped, tag = 'output window, operand 0, single buffered']
    #allocation8 [shape = 'u8[32768]{0}', space=vmem, size = 0x8000, scoped, tag = 'output window, operand 1, single buffered']
    #allocation9 [shape = 's32[1]{0}', space=sflag, size = 0x4, scoped, tag = 'scoped memory for tpu_custom_call.1']
    %9 = vsyncpa [#allocation3], 0
    %10 = vsyncpa [#allocation6], 0
    %11 = vsyncpa [#allocation4], 0
    %12 = vsyncpa [#allocation9], 0
    // Predicated region
    $region2: #{tpu_custom_call.1} parent=1 // pred_check
      _
    $region3: #{tpu_custom_call.1} parent=1 // pred_check_branch
      %14 = sbr.rel (0) target = $region5
    $region4: #{tpu_custom_call.1} parent=1 // pred_region
      %s16 = ssub.s32 2048, 2048
      %17 = vsyncadd [#allocation3], %s16
      %s18 = sshll.u32 [#allocation2], 4
      %s19 = int_to_ptr.vmem [resolvable:$true] %s18
      %24 = dma.hbm_to_vmem [thread:$0]  %s0, 2048, %s19, [#allocation3], 128, 128, 8
    $region5: #{tpu_custom_call.1} parent=1 // pred_fallthru
      _
    // Predicated region
    $region6: #{tpu_custom_call.1} parent=1 // pred_check
      _
    $region7: #{tpu_custom_call.1} parent=1 // pred_check_branch
      %26 = sbr.rel (0) target = $region9
    $region8: #{tpu_custom_call.1} parent=1 // pred_region
      %s28 = ssub.s32 2048, 2048
      %29 = vsyncadd [#allocation6], %s28
      %s30 = sshll.u32 [#allocation5], 4
      %s31 = int_to_ptr.vmem [resolvable:$true] %s30
      %36 = dma.hbm_to_vmem [thread:$0]  %s1, 2048, %s31, [#allocation6], 128, 128, 8
    $region9: #{tpu_custom_call.1} parent=1 // pred_fallthru
      _
    // Predicated region
    $region10: #{tpu_custom_call.1} parent=1 // pred_check
      _
    $region11: #{tpu_custom_call.1} parent=1 // pred_check_branch
      %38 = sbr.rel (0) target = $region13
    $region12: #{tpu_custom_call.1} parent=1 // pred_region
      %39 = dma.done [#allocation3], 2048
    $region13: #{tpu_custom_call.1} parent=1 // pred_fallthru
      _
    // Predicated region
    $region14: #{tpu_custom_call.1} parent=1 // pred_check
      _
    $region15: #{tpu_custom_call.1} parent=1 // pred_check_branch
      %41 = sbr.rel (0) target = $region17
    $region16: #{tpu_custom_call.1} parent=1 // pred_region
      %42 = dma.done [#allocation6], 2048
    $region17: #{tpu_custom_call.1} parent=1 // pred_fallthru
      _
    %p43 = scmp.eq.s32.totalorder 0, 0
    // Predicated region
    $region18: #{tpu_custom_call.1} parent=1 // pred_check
      %p44 = pneg %p43
    $region19: #{tpu_custom_call.1} parent=1 // pred_check_branch
      %46 = sbr.rel (%p44) target = $region21
    $region20: #{tpu_custom_call.1} parent=1 // pred_region
      %47 = vst [vmem:[#allocation7] sm:$0xff] 0.0
      %48 = vst [vmem:[#allocation7 + $0x8] sm:$0xff] 0.0
      %49 = vst [vmem:[#allocation7 + $0x10] sm:$0xff] 0.0
      %50 = vst [vmem:[#allocation7 + $0x18] sm:$0xff] 0.0
      %51 = vst [vmem:[#allocation7 + $0x20] sm:$0xff] 0.0
      %52 = vst [vmem:[#allocation7 + $0x28] sm:$0xff] 0.0
      %53 = vst [vmem:[#allocation7 + $0x30] sm:$0xff] 0.0
      %54 = vst [vmem:[#allocation7 + $0x38] sm:$0xff] 0.0
      %55 = vst [vmem:[#allocation7 + $0x40] sm:$0xff] 0.0
      %56 = vst [vmem:[#allocation7 + $0x48] sm:$0xff] 0.0
      %57 = vst [vmem:[#allocation7 + $0x50] sm:$0xff] 0.0
      %58 = vst [vmem:[#allocation7 + $0x58] sm:$0xff] 0.0
      %59 = vst [vmem:[#allocation7 + $0x60] sm:$0xff] 0.0
      %60 = vst [vmem:[#allocation7 + $0x68] sm:$0xff] 0.0
      %61 = vst [vmem:[#allocation7 + $0x70] sm:$0xff] 0.0
      %62 = vst [vmem:[#allocation7 + $0x78] sm:$0xff] 0.0
    $region21: #{tpu_custom_call.1} parent=1 // pred_fallthru
      _
    %v63 = vld [vmem:[#allocation7] sm:$0xff]
    %v64 = vld [vmem:[#allocation7 + $0x8] sm:$0xff]
    %v65 = vld [vmem:[#allocation7 + $0x10] sm:$0xff]
    %v66 = vld [vmem:[#allocation7 + $0x18] sm:$0xff]
    %v67 = vld [vmem:[#allocation7 + $0x20] sm:$0xff]
    %v68 = vld [vmem:[#allocation7 + $0x28] sm:$0xff]
    %v69 = vld [vmem:[#allocation7 + $0x30] sm:$0xff]
    %v70 = vld [vmem:[#allocation7 + $0x38] sm:$0xff]
    %v71 = vld [vmem:[#allocation7 + $0x40] sm:$0xff]
    %v72 = vld [vmem:[#allocation7 + $0x48] sm:$0xff]
    %v73 = vld [vmem:[#allocation7 + $0x50] sm:$0xff]
    %v74 = vld [vmem:[#allocation7 + $0x58] sm:$0xff]
    %v75 = vld [vmem:[#allocation7 + $0x60] sm:$0xff]
    %v76 = vld [vmem:[#allocation7 + $0x68] sm:$0xff]
    %v77 = vld [vmem:[#allocation7 + $0x70] sm:$0xff]
    %v78 = vld [vmem:[#allocation7 + $0x78] sm:$0xff]
    %v79 = vld [vmem:[#allocation2] sm:$0xff]
    %v80 = vld [vmem:[#allocation2 + $0x8] sm:$0xff]
    %v81 = vld [vmem:[#allocation2 + $0x10] sm:$0xff]
    %v82 = vld [vmem:[#allocation2 + $0x18] sm:$0xff]
    %v83 = vld [vmem:[#allocation2 + $0x20] sm:$0xff]
    %v84 = vld [vmem:[#allocation2 + $0x28] sm:$0xff]
    %v85 = vld [vmem:[#allocation2 + $0x30] sm:$0xff]
    %v86 = vld [vmem:[#allocation2 + $0x38] sm:$0xff]
    %v87 = vld [vmem:[#allocation2 + $0x40] sm:$0xff]
    %v88 = vld [vmem:[#allocation2 + $0x48] sm:$0xff]
    %v89 = vld [vmem:[#allocation2 + $0x50] sm:$0xff]
    %v90 = vld [vmem:[#allocation2 + $0x58] sm:$0xff]
    %v91 = vld [vmem:[#allocation2 + $0x60] sm:$0xff]
    %v92 = vld [vmem:[#allocation2 + $0x68] sm:$0xff]
    %v93 = vld [vmem:[#allocation2 + $0x70] sm:$0xff]
    %v94 = vld [vmem:[#allocation2 + $0x78] sm:$0xff]
    %v95 = vld [vmem:[#allocation5] sm:$0xff]
    %v96 = vld [vmem:[#allocation5 + $0x8] sm:$0xff]
    %v97 = vld [vmem:[#allocation5 + $0x10] sm:$0xff]
    %v98 = vld [vmem:[#allocation5 + $0x18] sm:$0xff]
    %v99 = vld [vmem:[#allocation5 + $0x20] sm:$0xff]
    %v100 = vld [vmem:[#allocation5 + $0x28] sm:$0xff]
    %v101 = vld [vmem:[#allocation5 + $0x30] sm:$0xff]
    %v102 = vld [vmem:[#allocation5 + $0x38] sm:$0xff]
    %v103 = vld [vmem:[#allocation5 + $0x40] sm:$0xff]
    %v104 = vld [vmem:[#allocation5 + $0x48] sm:$0xff]
    %v105 = vld [vmem:[#allocation5 + $0x50] sm:$0xff]
    %v106 = vld [vmem:[#allocation5 + $0x58] sm:$0xff]
    %v107 = vld [vmem:[#allocation5 + $0x60] sm:$0xff]
    %v108 = vld [vmem:[#allocation5 + $0x68] sm:$0xff]
    %v109 = vld [vmem:[#allocation5 + $0x70] sm:$0xff]
    %v110 = vld [vmem:[#allocation5 + $0x78] sm:$0xff]
    %111 = vmatprep.subr.mxu0 0.0
    %112 = vmatpush1.msra.mxu0 %v95
    %113 = vmatprep.subr.mxu0 0.0
    %114 = vmatpush1.msra.mxu0 %v96
    %115 = vmatprep.subr.mxu0 0.0
    %116 = vmatpush1.msra.mxu0 %v97
    %117 = vmatprep.subr.mxu0 0.0
    %118 = vmatpush1.msra.mxu0 %v98
    %119 = vmatprep.subr.mxu0 0.0
    %120 = vmatpush1.msra.mxu0 %v99
    %121 = vmatprep.subr.mxu0 0.0
    %122 = vmatpush1.msra.mxu0 %v100
    %123 = vmatprep.subr.mxu0 0.0
    %124 = vmatpush1.msra.mxu0 %v101
    %125 = vmatprep.subr.mxu0 0.0
    %126 = vmatpush1.msra.mxu0 %v102
    %127 = vmatprep.subr.mxu0 0.0
    %128 = vmatpush1.msra.mxu0 %v103
    %129 = vmatprep.subr.mxu0 0.0
    %130 = vmatpush1.msra.mxu0 %v104
    %131 = vmatprep.subr.mxu0 0.0
    %132 = vmatpush1.msra.mxu0 %v105
    %133 = vmatprep.subr.mxu0 0.0
    %134 = vmatpush1.msra.mxu0 %v106
    %135 = vmatprep.subr.mxu0 0.0
    %136 = vmatpush1.msra.mxu0 %v107
    %137 = vmatprep.subr.mxu0 0.0
    %138 = vmatpush1.msra.mxu0 %v108
    %139 = vmatprep.subr.mxu0 0.0
    %140 = vmatpush1.msra.mxu0 %v109
    %141 = vmatprep.subr.mxu0 0.0
    %142 = vmatpush1.msra.mxu0 %v110
    %143 = vmatprep.subr.mxu0 0.0
    %144 = vmatpush1.msra.mxu0 0.0
    %145 = vmatprep.subr.mxu0 0.0
    %146 = vmatpush1.msra.mxu0 0.0
    %147 = vmatprep.subr.mxu0 0.0
    %148 = vmatpush1.msra.mxu0 0.0
    %149 = vmatprep.subr.mxu0 0.0
    %150 = vmatpush1.msra.mxu0 0.0
    %151 = vmatprep.subr.mxu0 0.0
    %152 = vmatpush1.msra.mxu0 0.0
    %153 = vmatprep.subr.mxu0 0.0
    %154 = vmatpush1.msra.mxu0 0.0
    %155 = vmatprep.subr.mxu0 0.0
    %156 = vmatpush1.msra.mxu0 0.0
    %157 = vmatprep.subr.mxu0 0.0
    %158 = vmatpush1.msra.mxu0 0.0
    %159 = vmatprep.subr.mxu0 0.0
    %160 = vmatpush1.msra.mxu0 0.0
    %161 = vmatprep.subr.mxu0 0.0
    %162 = vmatpush1.msra.mxu0 0.0
    %163 = vmatprep.subr.mxu0 0.0
    %164 = vmatpush1.msra.mxu0 0.0
    %165 = vmatprep.subr.mxu0 0.0
    %166 = vmatpush1.msra.mxu0 0.0
    %167 = vmatprep.subr.mxu0 0.0
    %168 = vmatpush1.msra.mxu0 0.0
    %169 = vmatprep.subr.mxu0 0.0
    %170 = vmatpush1.msra.mxu0 0.0
    %171 = vmatprep.subr.mxu0 0.0
    %172 = vmatpush1.msra.mxu0 0.0
    %173 = vmatprep.subr.mxu0 0.0
    %174 = vmatpush1.msra.mxu0 0.0
    %175 = vmatprep.mubr.f32.mxu0 0.0
    %176 = vmatmul.mubr.f32.gmra.mrb[0].mxu0 %v79
    %v177 = vpop.f32.mrb[0].mxu0
    %v178 = vadd.f32 0.0, %v177
    %v179 = vpop.f32.mrb[0].mxu0
    %180 = vmatprep.mubr.f32.mxu0 0.0
    %181 = vmatmul.mubr.f32.gmra.mrb[0].mxu0 %v80
    %v182 = vpop.f32.mrb[0].mxu0
    %v183 = vadd.f32 0.0, %v182
    %v184 = vpop.f32.mrb[0].mxu0
    %185 = vmatprep.mubr.f32.mxu0 0.0
    %186 = vmatmul.mubr.f32.gmra.mrb[0].mxu0 %v81
    %v187 = vpop.f32.mrb[0].mxu0
    %v188 = vadd.f32 0.0, %v187
    %v189 = vpop.f32.mrb[0].mxu0
    %190 = vmatprep.mubr.f32.mxu0 0.0
    %191 = vmatmul.mubr.f32.gmra.mrb[0].mxu0 %v82
    %v192 = vpop.f32.mrb[0].mxu0
    %v193 = vadd.f32 0.0, %v192
    %v194 = vpop.f32.mrb[0].mxu0
    %195 = vmatprep.mubr.f32.mxu0 0.0
    %196 = vmatmul.mubr.f32.gmra.mrb[0].mxu0 %v83
    %v197 = vpop.f32.mrb[0].mxu0
    %v198 = vadd.f32 0.0, %v197
    %v199 = vpop.f32.mrb[0].mxu0
    %200 = vmatprep.mubr.f32.mxu0 0.0
    %201 = vmatmul.mubr.f32.gmra.mrb[0].mxu0 %v84
    %v202 = vpop.f32.mrb[0].mxu0
    %v203 = vadd.f32 0.0, %v202
    %v204 = vpop.f32.mrb[0].mxu0
    %205 = vmatprep.mubr.f32.mxu0 0.0
    %206 = vmatmul.mubr.f32.gmra.mrb[0].mxu0 %v85
    %v207 = vpop.f32.mrb[0].mxu0
    %v208 = vadd.f32 0.0, %v207
    %v209 = vpop.f32.mrb[0].mxu0
    %210 = vmatprep.mubr.f32.mxu0 0.0
    %211 = vmatmul.mubr.f32.gmra.mrb[0].mxu0 %v86
    %v212 = vpop.f32.mrb[0].mxu0
    %v213 = vadd.f32 0.0, %v212
    %v214 = vpop.f32.mrb[0].mxu0
    %215 = vmatprep.mubr.f32.mxu0 0.0
    %216 = vmatmul.mubr.f32.gmra.mrb[0].mxu0 %v87
    %v217 = vpop.f32.mrb[0].mxu0
    %v218 = vadd.f32 0.0, %v217
    %v219 = vpop.f32.mrb[0].mxu0
    %220 = vmatprep.mubr.f32.mxu0 0.0
    %221 = vmatmul.mubr.f32.gmra.mrb[0].mxu0 %v88
    %v222 = vpop.f32.mrb[0].mxu0
    %v223 = vadd.f32 0.0, %v222
    %v224 = vpop.f32.mrb[0].mxu0
    %225 = vmatprep.mubr.f32.mxu0 0.0
    %226 = vmatmul.mubr.f32.gmra.mrb[0].mxu0 %v89
    %v227 = vpop.f32.mrb[0].mxu0
    %v228 = vadd.f32 0.0, %v227
    %v229 = vpop.f32.mrb[0].mxu0
    %230 = vmatprep.mubr.f32.mxu0 0.0
    %231 = vmatmul.mubr.f32.gmra.mrb[0].mxu0 %v90
    %v232 = vpop.f32.mrb[0].mxu0
    %v233 = vadd.f32 0.0, %v232
    %v234 = vpop.f32.mrb[0].mxu0
    %235 = vmatprep.mubr.f32.mxu0 0.0
    %236 = vmatmul.mubr.f32.gmra.mrb[0].mxu0 %v91
    %v237 = vpop.f32.mrb[0].mxu0
    %v238 = vadd.f32 0.0, %v237
    %v239 = vpop.f32.mrb[0].mxu0
    %240 = vmatprep.mubr.f32.mxu0 0.0
    %241 = vmatmul.mubr.f32.gmra.mrb[0].mxu0 %v92
    %v242 = vpop.f32.mrb[0].mxu0
    %v243 = vadd.f32 0.0, %v242
    %v244 = vpop.f32.mrb[0].mxu0
    %245 = vmatprep.mubr.f32.mxu0 0.0
    %246 = vmatmul.mubr.f32.gmra.mrb[0].mxu0 %v93
    %v247 = vpop.f32.mrb[0].mxu0
    %v248 = vadd.f32 0.0, %v247
    %v249 = vpop.f32.mrb[0].mxu0
    %250 = vmatprep.mubr.f32.mxu0 0.0
    %251 = vmatmul.mubr.f32.gmra.mrb[0].mxu0 %v94
    %v252 = vpop.f32.mrb[0].mxu0
    %v253 = vadd.f32 0.0, %v252
    %v254 = vpop.f32.mrb[0].mxu0
    %255 = vdwg.mxu0
    %v256 = vadd.f32 %v63, %v178
    %v257 = vadd.f32 %v64, %v183
    %v258 = vadd.f32 %v65, %v188
    %v259 = vadd.f32 %v66, %v193
    %v260 = vadd.f32 %v67, %v198
    %v261 = vadd.f32 %v68, %v203
    %v262 = vadd.f32 %v69, %v208
    %v263 = vadd.f32 %v70, %v213
    %v264 = vadd.f32 %v71, %v218
    %v265 = vadd.f32 %v72, %v223
    %v266 = vadd.f32 %v73, %v228
    %v267 = vadd.f32 %v74, %v233
    %v268 = vadd.f32 %v75, %v238
    %v269 = vadd.f32 %v76, %v243
    %v270 = vadd.f32 %v77, %v248
    %v271 = vadd.f32 %v78, %v253
    %272 = vst [vmem:[#allocation7] sm:$0xff] %v256
    %273 = vst [vmem:[#allocation7 + $0x8] sm:$0xff] %v257
    %274 = vst [vmem:[#allocation7 + $0x10] sm:$0xff] %v258
    %275 = vst [vmem:[#allocation7 + $0x18] sm:$0xff] %v259
    %276 = vst [vmem:[#allocation7 + $0x20] sm:$0xff] %v260
    %277 = vst [vmem:[#allocation7 + $0x28] sm:$0xff] %v261
    %278 = vst [vmem:[#allocation7 + $0x30] sm:$0xff] %v262
    %279 = vst [vmem:[#allocation7 + $0x38] sm:$0xff] %v263
    %280 = vst [vmem:[#allocation7 + $0x40] sm:$0xff] %v264
    %281 = vst [vmem:[#allocation7 + $0x48] sm:$0xff] %v265
    %282 = vst [vmem:[#allocation7 + $0x50] sm:$0xff] %v266
    %283 = vst [vmem:[#allocation7 + $0x58] sm:$0xff] %v267
    %284 = vst [vmem:[#allocation7 + $0x60] sm:$0xff] %v268
    %285 = vst [vmem:[#allocation7 + $0x68] sm:$0xff] %v269
    %286 = vst [vmem:[#allocation7 + $0x70] sm:$0xff] %v270
    %287 = vst [vmem:[#allocation7 + $0x78] sm:$0xff] %v271
    // Predicated region
    $region22: #{tpu_custom_call.1} parent=1 // pred_check
      %p288 = pneg %p43
    $region23: #{tpu_custom_call.1} parent=1 // pred_check_branch
      %290 = sbr.rel (%p288) target = $region25
    $region24: #{tpu_custom_call.1} parent=1 // pred_region
      %v291 = vld [vmem:[#allocation7] sm:$0xff]
      %v292 = vld [vmem:[#allocation7 + $0x8] sm:$0xff]
      %v293 = vld [vmem:[#allocation7 + $0x10] sm:$0xff]
      %v294 = vld [vmem:[#allocation7 + $0x18] sm:$0xff]
      %v295 = vld [vmem:[#allocation7 + $0x20] sm:$0xff]
      %v296 = vld [vmem:[#allocation7 + $0x28] sm:$0xff]
      %v297 = vld [vmem:[#allocation7 + $0x30] sm:$0xff]
      %v298 = vld [vmem:[#allocation7 + $0x38] sm:$0xff]
      %v299 = vld [vmem:[#allocation7 + $0x40] sm:$0xff]
      %v300 = vld [vmem:[#allocation7 + $0x48] sm:$0xff]
      %v301 = vld [vmem:[#allocation7 + $0x50] sm:$0xff]
      %v302 = vld [vmem:[#allocation7 + $0x58] sm:$0xff]
      %v303 = vld [vmem:[#allocation7 + $0x60] sm:$0xff]
      %v304 = vld [vmem:[#allocation7 + $0x68] sm:$0xff]
      %v305 = vld [vmem:[#allocation7 + $0x70] sm:$0xff]
      %v306 = vld [vmem:[#allocation7 + $0x78] sm:$0xff]
      %v307 = vpack.c.bf16 %v292, %v291
      %v308 = vpack.c.bf16 %v294, %v293
      %v309 = vpack.c.bf16 %v296, %v295
      %v310 = vpack.c.bf16 %v298, %v297
      %v311 = vpack.c.bf16 %v300, %v299
      %v312 = vpack.c.bf16 %v302, %v301
      %v313 = vpack.c.bf16 %v304, %v303
      %v314 = vpack.c.bf16 %v306, %v305
      %v323 = vunpack.c.l.b16 %v307
      %v324 = vunpack.c.h.b16 %v307
      %v325 = vunpack.c.l.b16 %v308
      %v326 = vunpack.c.h.b16 %v308
      %v327 = vunpack.c.l.b16 %v309
      %v328 = vunpack.c.h.b16 %v309
      %v329 = vunpack.c.l.b16 %v310
      %v330 = vunpack.c.h.b16 %v310
      %v331 = vunpack.c.l.b16 %v311
      %v332 = vunpack.c.h.b16 %v311
      %v333 = vunpack.c.l.b16 %v312
      %v334 = vunpack.c.h.b16 %v312
      %v335 = vunpack.c.l.b16 %v313
      %v336 = vunpack.c.h.b16 %v313
      %v337 = vunpack.c.l.b16 %v314
      %v338 = vunpack.c.h.b16 %v314
      %v339 = vpack.c.b16 %v323, %v323
      %v340 = vpack.c.b16 %v324, %v324
      %v341 = vpack.c.b16 %v325, %v325
      %v342 = vpack.c.b16 %v326, %v326
      %v343 = vpack.c.b16 %v327, %v327
      %v344 = vpack.c.b16 %v328, %v328
      %v345 = vpack.c.b16 %v329, %v329
      %v346 = vpack.c.b16 %v330, %v330
      %v347 = vpack.c.b16 %v331, %v331
      %v348 = vpack.c.b16 %v332, %v332
      %v349 = vpack.c.b16 %v333, %v333
      %v350 = vpack.c.b16 %v334, %v334
      %v351 = vpack.c.b16 %v335, %v335
      %v352 = vpack.c.b16 %v336, %v336
      %v353 = vpack.c.b16 %v337, %v337
      %v354 = vpack.c.b16 %v338, %v338
      %371 = vst [vmem:[#allocation8] sm:$0xf] %v339
      %372 = vst [vmem:[#allocation8 + $0x4] sm:$0xf] %v340
      %373 = vst [vmem:[#allocation8 + $0x8] sm:$0xf] %v341
      %374 = vst [vmem:[#allocation8 + $0xc] sm:$0xf] %v342
      %375 = vst [vmem:[#allocation8 + $0x10] sm:$0xf] %v343
      %376 = vst [vmem:[#allocation8 + $0x14] sm:$0xf] %v344
      %377 = vst [vmem:[#allocation8 + $0x18] sm:$0xf] %v345
      %378 = vst [vmem:[#allocation8 + $0x1c] sm:$0xf] %v346
      %379 = vst [vmem:[#allocation8 + $0x20] sm:$0xf] %v347
      %380 = vst [vmem:[#allocation8 + $0x24] sm:$0xf] %v348
      %381 = vst [vmem:[#allocation8 + $0x28] sm:$0xf] %v349
      %382 = vst [vmem:[#allocation8 + $0x2c] sm:$0xf] %v350
      %383 = vst [vmem:[#allocation8 + $0x30] sm:$0xf] %v351
      %384 = vst [vmem:[#allocation8 + $0x34] sm:$0xf] %v352
      %385 = vst [vmem:[#allocation8 + $0x38] sm:$0xf] %v353
      %386 = vst [vmem:[#allocation8 + $0x3c] sm:$0xf] %v354
    $region25: #{tpu_custom_call.1} parent=1 // pred_fallthru
      _
    // Predicated region
    $region26: #{tpu_custom_call.1} parent=1 // pred_check
      _
    $region27: #{tpu_custom_call.1} parent=1 // pred_check_branch
      %388 = sbr.rel (0) target = $region29
    $region28: #{tpu_custom_call.1} parent=1 // pred_region
      %s390 = ssub.s32 2048, 2048
      %391 = vsyncadd [#allocation4], %s390
      %s392 = sshll.u32 [#allocation7], 4
      %s393 = int_to_ptr.vmem [resolvable:$true] %s392
      %398 = dma.vmem_to_hbm [thread:$0]  %s393, 2048, %s2, [#allocation4], 128, 128, 8
    $region29: #{tpu_custom_call.1} parent=1 // pred_fallthru
      _
    // Predicated region
    $region30: #{tpu_custom_call.1} parent=1 // pred_check
      _
    $region31: #{tpu_custom_call.1} parent=1 // pred_check_branch
      %400 = sbr.rel (0) target = $region33
    $region32: #{tpu_custom_call.1} parent=1 // pred_region
      %s402 = ssub.s32 1024, 1024
      %403 = vsyncadd [#allocation9], %s402
      %s404 = sshll.u32 [#allocation8], 4
      %s405 = int_to_ptr.vmem [resolvable:$true] %s404
      %410 = dma.vmem_to_hbm [thread:$0]  %s405, 1024, %s3, [#allocation9], 64, 64, 4
    $region33: #{tpu_custom_call.1} parent=1 // pred_fallthru
      _
    // Predicated region
    $region34: #{tpu_custom_call.1} parent=1 // pred_check
      _
    $region35: #{tpu_custom_call.1} parent=1 // pred_check_branch
      %412 = sbr.rel (0) target = $region37
    $region36: #{tpu_custom_call.1} parent=1 // pred_region
      %413 = dma.done [#allocation4], 2048
    $region37: #{tpu_custom_call.1} parent=1 // pred_fallthru
      _
    // Predicated region
    $region38: #{tpu_custom_call.1} parent=1 // pred_check
      _
    $region39: #{tpu_custom_call.1} parent=1 // pred_check_branch
      %415 = sbr.rel (0) target = $region41
    $region40: #{tpu_custom_call.1} parent=1 // pred_region
      %416 = dma.done [#allocation9], 1024
    $region41: #{tpu_custom_call.1} parent=1 // pred_fallthru
      _
    %417 = vsyncpa [#allocation3], 1
    %418 = vsyncpa [#allocation6], 1
    %419 = vsyncpa [#allocation4], 1
    %420 = vsyncpa [#allocation9], 1

</llo_original>
